<compile_context>
chip_gen: v6e
topology: v6e:2x2x1
jax: 0.10.0
libtpu: 0.0.40
codegen_flags: <defaults>
</compile_context>

<pallas_src>
import math

import jax
import jax.numpy as jnp
from jax.experimental import pallas as pl
from jax.experimental.pallas import tpu as pltpu

# --- shapes implied by the module (ionosphere dataset) ----------------------
N_FEATURES = 34
HIDDEN = int(math.sqrt(N_FEATURES))   # = 5
N_CLASSES = 2

LANE = 128
W2_COL = 64                            # lane offset of W2/b2 inside the param slab
MAX_TILE_B = 32 * 1024                 # v5e scoped-VMEM-safe batch-tile cap


def _round_up(n, m):
    return ((n + m - 1) // m) * m


def _choose_tile_b(batch):
    """Largest lane-aligned batch tile that (a) keeps v5e VMEM happy and
    (b) yields >= 2 balanced tiles when possible so v7x's 2 TCs split the grid."""
    b128 = _round_up(max(batch, 1), LANE)
    if b128 <= LANE:                    # tiny batch: single 128-column tile
        return LANE
    if b128 <= 2 * MAX_TILE_B:          # split whole batch into 2 balanced tiles
        return _round_up(pl.cdiv(b128, 2), LANE)
    return MAX_TILE_B                   # huge batch: cap tile size, many tiles


def _pack_params(w1, b1, w2, b2):
    """Pack W1,b1,W2,b2 into one (8,128) f32 slab (a single vreg / single DMA).

    Layout:  [0:5,  0:34 ] = W1      [0:5, 34    ] = b1
             [0:2, 64:69 ] = W2      [0:2, 69    ] = b2
    """
    slab = jnp.zeros((8, LANE), jnp.float32)
    slab = slab.at[0:HIDDEN, 0:N_FEATURES].set(w1.astype(jnp.float32))
    slab = slab.at[0:HIDDEN, N_FEATURES].set(b1.astype(jnp.float32).reshape(HIDDEN))
    slab = slab.at[0:N_CLASSES, W2_COL:W2_COL + HIDDEN].set(w2.astype(jnp.float32))
    slab = slab.at[0:N_CLASSES, W2_COL + HIDDEN].set(b2.astype(jnp.float32).reshape(N_CLASSES))
    return slab


def mlp_softmax_kernel(p_ref, x_ref, o_ref):
    """Fused batch-on-lanes MLP: softmax(W2 @ relu(W1 @ x + b1) + b2) over classes."""
    # Static slices of the resident parameter slab (zero-cost ref views + tiny loads).
    w1 = p_ref[0:HIDDEN, 0:N_FEATURES]                                   # (5, 34)
    b1 = p_ref[0:HIDDEN, N_FEATURES:N_FEATURES + 1]                      # (5, 1)
    w2 = p_ref[0:N_CLASSES, W2_COL:W2_COL + HIDDEN]                      # (2, 5)
    b2 = p_ref[0:N_CLASSES, W2_COL + HIDDEN:W2_COL + HIDDEN + 1]         # (2, 1)

    x = x_ref[...]                                                       # (F, TB)
    h = jnp.dot(w1, x, preferred_element_type=jnp.float32) + b1          # (H, TB)
    h = jnp.maximum(h, 0.0)                                              # ReLU
    logits = jnp.dot(w2, h, preferred_element_type=jnp.float32) + b2     # (C, TB)

    # Numerically-stable softmax over the class axis (axis 0, 2 sublanes).
    # Exact division so probabilities sum to 1 to f32 rounding.
    m = jnp.max(logits, axis=0, keepdims=True)
    e = jnp.exp(logits - m)
    o_ref[...] = e / jnp.sum(e, axis=0, keepdims=True)                   # lane-dense store


def _forward(features_batch, w1, b1, w2, b2):
    """features_batch: (nFeatures, batch), PyTorch-style. Returns (batch, nClasses)."""
    x = features_batch.astype(jnp.float32)            # (F, B) -- no transpose, no pad
    batch = x.shape[1]

    params = _pack_params(w1, b1, w2, b2)              # (8, 128) resident slab

    tile_b = _choose_tile_b(batch)
    n_tiles = pl.cdiv(batch, tile_b)                   # last tile may overrun (OK)

    cols = n_tiles * tile_b
    cost = pl.CostEstimate(
        flops=2 * cols * (N_FEATURES * HIDDEN + HIDDEN * N_CLASSES)
              + 8 * cols * N_CLASSES,
        transcendentals=cols * N_CLASSES,
        bytes_accessed=4 * (N_FEATURES * batch + N_CLASSES * batch + 8 * LANE),
    )

    out = pl.pallas_call(
        mlp_softmax_kernel,
        out_shape=jax.ShapeDtypeStruct((N_CLASSES, batch), jnp.float32),
        grid=(n_tiles,),
        in_specs=[
            pl.BlockSpec((8, LANE), lambda i: (0, 0)),              # params, resident
            pl.BlockSpec((N_FEATURES, tile_b), lambda i: (0, i)),   # x tile, streamed
        ],
        out_specs=pl.BlockSpec((N_CLASSES, tile_b), lambda i: (0, i)),
        compiler_params=pltpu.CompilerParams(
            dimension_semantics=("parallel",)),
        cost_estimate=cost,
    )(params, x)

    # (nClasses, batch) -> (batch, nClasses) to match the torch module output.
    # Kept in the wrapper on purpose: an in-kernel (B,2) store would be 2-lane masked.
    return out.T


my_model_forward = jax.jit(_forward)


def init_params(key):
    """Deterministic init mirroring nn.Linear's U(-1/sqrt(fan_in), 1/sqrt(fan_in))."""
    k1, k2, k3, k4 = jax.random.split(key, 4)
    bound1 = 1.0 / math.sqrt(N_FEATURES)
    bound2 = 1.0 / math.sqrt(HIDDEN)
    w1 = jax.random.uniform(k1, (HIDDEN, N_FEATURES), jnp.float32, -bound1, bound1)
    b1 = jax.random.uniform(k2, (HIDDEN,), jnp.float32, -bound1, bound1)
    w2 = jax.random.uniform(k3, (N_CLASSES, HIDDEN), jnp.float32, -bound2, bound2)
    b2 = jax.random.uniform(k4, (N_CLASSES,), jnp.float32, -bound2, bound2)
    return w1, b1, w2, b2


if __name__ == "__main__":
    # TODO(synk): the torch module also stashes the input as a Variable
    # (self.invar) for autograd; only the inference forward is implemented here.
    key = jax.random.PRNGKey(0)
    pkey, xkey = jax.random.split(key)
    w1, b1, w2, b2 = init_params(pkey)

    batch = 8
    # PyTorch forward expects (nFeatures, batch) and transposes it internally;
    # the kernel consumes that layout directly (batch-on-lanes).
    features_batch = jax.random.normal(xkey, (N_FEATURES, batch), jnp.float32)

    out = my_model_forward(features_batch, w1, b1, w2, b2)
    out = jax.block_until_ready(out)

    # pure-JAX reference of the torch forward pass
    x_t = features_batch.T                                     # (B, F)
    h_ref = jnp.maximum(x_t @ w1.T + b1, 0.0)
    ref = jax.nn.softmax(h_ref @ w2.T + b2, axis=-1)

    assert out.shape == (batch, N_CLASSES)
    assert bool(jnp.all(jnp.isfinite(out)))
    # exact division -> rows sum to 1 up to f32 rounding
    assert jnp.allclose(jnp.sum(out, axis=-1), 1.0, atol=1e-5)
    assert jnp.allclose(out, ref, atol=2e-3, rtol=2e-3)

    print("KERNEL_OK")
</pallas_src>

<mosaic_0001>
module attributes {stable_mosaic.version = 11 : i64} {
  func.func @mlp_softmax_kernel(%arg0: i32, %arg1: memref<8x128xf32, #tpu.memory_space<vmem>>, %arg2: memref<34x128xf32, #tpu.memory_space<vmem>>, %arg3: memref<2x128xf32, #tpu.memory_space<vmem>>) attributes {dimension_semantics = [#tpu.dimension_semantics<parallel>], iteration_bounds = array<i64: 1>, scalar_prefetch = 0 : i64, scratch_operands = 0 : i64, tpu.core_type = #tpu.core_type<tc>, window_params = [{pipeline_mode = #tpu.pipeline_mode<synchronous>, transform_indices = @transform_0, window_bounds = array<i64: 8, 128>}, {transform_indices = @transform_1, window_bounds = array<i64: 34, 128>}, {transform_indices = @transform_2, window_bounds = array<i64: 2, 128>}]} {
    %c0 = arith.constant 0 : index
    %c0_0 = arith.constant 0 : index
    %0 = vector.load %arg1[%c0, %c0_0] : memref<8x128xf32, #tpu.memory_space<vmem>>, vector<5x34xf32>
    %c0_1 = arith.constant 0 : index
    %c34 = arith.constant 34 : index
    %1 = vector.load %arg1[%c0_1, %c34] : memref<8x128xf32, #tpu.memory_space<vmem>>, vector<5x1xf32>
    %c0_2 = arith.constant 0 : index
    %c64 = arith.constant 64 : index
    %2 = vector.load %arg1[%c0_2, %c64] : memref<8x128xf32, #tpu.memory_space<vmem>>, vector<2x5xf32>
    %c0_3 = arith.constant 0 : index
    %c69 = arith.constant 69 : index
    %3 = vector.load %arg1[%c0_3, %c69] : memref<8x128xf32, #tpu.memory_space<vmem>>, vector<2x1xf32>
    %c0_4 = arith.constant 0 : index
    %c0_5 = arith.constant 0 : index
    %4 = vector.load %arg2[%c0_4, %c0_5] : memref<34x128xf32, #tpu.memory_space<vmem>>, vector<34x128xf32>
    %cst = arith.constant dense<0.000000e+00> : vector<5x128xf32>
    %5 = tpu.matmul %0, %4, %cst {dimension_numbers = #tpu.dot_dimension_numbers<[1], [0], [0], [1], [0, 0, 1, 1], [], []>} : vector<5x34xf32>, vector<34x128xf32>, vector<5x128xf32> -> vector<5x128xf32>
    %6 = vector.broadcast %1 : vector<5x1xf32> to vector<5x128xf32>
    %7 = arith.addf %5, %6 : vector<5x128xf32>
    %cst_6 = arith.constant 0.000000e+00 : f32
    %8 = vector.broadcast %cst_6 : f32 to vector<5x128xf32>
    %9 = arith.maximumf %7, %8 : vector<5x128xf32>
    %cst_7 = arith.constant dense<0.000000e+00> : vector<2x128xf32>
    %10 = tpu.matmul %2, %9, %cst_7 {dimension_numbers = #tpu.dot_dimension_numbers<[1], [0], [0], [1], [0, 0, 1, 1], [], []>} : vector<2x5xf32>, vector<5x128xf32>, vector<2x128xf32> -> vector<2x128xf32>
    %11 = vector.broadcast %3 : vector<2x1xf32> to vector<2x128xf32>
    %12 = arith.addf %10, %11 : vector<2x128xf32>
    %cst_8 = arith.constant dense<0xFF800000> : vector<128xf32>
    %13 = vector.multi_reduction <maximumf>, %12, %cst_8 [0] : vector<2x128xf32> to vector<128xf32>
    %14 = vector.shape_cast %13 : vector<128xf32> to vector<1x128xf32>
    %15 = vector.broadcast %14 : vector<1x128xf32> to vector<2x128xf32>
    %16 = arith.subf %12, %15 : vector<2x128xf32>
    %17 = math.exp %16 : vector<2x128xf32>
    %cst_9 = arith.constant dense<0.000000e+00> : vector<128xf32>
    %18 = vector.multi_reduction <add>, %17, %cst_9 [0] : vector<2x128xf32> to vector<128xf32>
    %19 = vector.shape_cast %18 : vector<128xf32> to vector<1x128xf32>
    %20 = vector.broadcast %19 : vector<1x128xf32> to vector<2x128xf32>
    %21 = arith.divf %17, %20 : vector<2x128xf32>
    %c0_10 = arith.constant 0 : index
    %c0_11 = arith.constant 0 : index
    %22 = vector.load %arg3[%c0_10, %c0_11] : memref<2x128xf32, #tpu.memory_space<vmem>>, vector<2x128xf32>
    tpu.vector_store %arg3[%c0_10, %c0_11], %21 {strides = array<i32>} : memref<2x128xf32, #tpu.memory_space<vmem>>, vector<2x128xf32>,
    return
  }
  func.func @transform_0(%arg0: i32) -> (i32, i32) {
    %c0_i32 = arith.constant 0 : i32
    %c0_i32_0 = arith.constant 0 : i32
    %c0_i32_1 = arith.constant 0 : i32
    return %c0_i32, %c0_i32_0 : i32, i32
  }
  func.func @transform_1(%arg0: i32) -> (i32, i32) {
    %c0_i32 = arith.constant 0 : i32
    %c0_i32_0 = arith.constant 0 : i32
    return %c0_i32, %arg0 : i32, i32
  }
  func.func @transform_2(%arg0: i32) -> (i32, i32) {
    %c0_i32 = arith.constant 0 : i32
    %c0_i32_0 = arith.constant 0 : i32
    return %c0_i32, %arg0 : i32, i32
  }
}

</mosaic_0001>

<llo_original>
// kernel: _forward.1
$region0: #{_forward.1}
  #allocation0 [shape = 'u32[]', space=smem, size = 0x4, offset = 0x4, fixed_abs, tag = 'smem constant byte address 0x4 - core index']
  #allocation1 [shape = 'u32[144,128]{1,0:T(1,128)}', space=vmem, size = 0x12000, scoped, tag = 'internal scratch']
  %s0 = inlined_call_operand.vmem [shape: f32[8,128], index: 0, kind: input, shape index: {}]
  %s1 = inlined_call_operand.vmem [shape: f32[34,8], index: 1, kind: input, shape index: {}]
  %s2 = inlined_call_operand.hbm [shape: f32[2,8], index: 2, kind: output, shape index: {}]
  %s3 = sld [smem:[#allocation0]]
  $region18: #{_forward.1} parent=0
    _
  %s5 = ssub.s32 1, %s3
  %s6 = scalar_select 0, %s5, %s3
  $region1: #{_forward.1} parent=0
    #allocation2 [shape = 'u8[1024]{0}', space=vmem, size = 0x400, scoped, tag = 'output window, operand 0, single buffered']
    #allocation3 [shape = 's32[1]{0}', space=sflag, size = 0x4, scoped, tag = 'scoped memory for _forward.1']
    %7 = vsyncpa [#allocation3], 0
    // Predicated region
    $region2: #{_forward.1} parent=1 // pred_check
      _
    $region3: #{_forward.1} parent=1 // pred_check_branch
      %9 = sbr.rel (0) target = $region5
    $region4: #{_forward.1} parent=1 // pred_region
      _
    $region5: #{_forward.1} parent=1 // pred_fallthru
      _
    // Predicated region
    $region6: #{_forward.1} parent=1 // pred_check
      _
    $region7: #{_forward.1} parent=1 // pred_check_branch
      %11 = sbr.rel (0) target = $region9
    $region8: #{_forward.1} parent=1 // pred_region
      _
    $region9: #{_forward.1} parent=1 // pred_fallthru
      _
    %v12 = vld [vmem:[%s0] sm:$0x1f]
    %v13 = vld [vmem:[%s0] sm:$0x3]
    %v14 = vld [vmem:[%s1] sm:$0xff]
    %v15 = vld [vmem:[%s1 + $0x8] sm:$0xff]
    %v16 = vld [vmem:[%s1 + $0x10] sm:$0xff]
    %v17 = vld [vmem:[%s1 + $0x18] sm:$0xff]
    %v18 = vld [vmem:[%s1 + $0x20] sm:$0x3]
    %20 = vset.pattern.permute.xlu0 34
    %21 = vperm.xlu0 %20, %v12
    %v22 = vpop.permute.xlu0 %21
    %vm24 = vcmask 277504
    %v25 = vsel %vm24, %v12, 0
    %vm27 = vcmask 1041408
    %v29 = vsel %vm27, %v18, 0
    %31 = vmatprep.subr.mxu0 0.0
    %32 = vmatpush1.msra.mxu0 0.0
    %33 = vmatprep.subr.mxu0 0.0
    %34 = vmatpush1.msra.mxu0 0.0
    %35 = vmatprep.subr.mxu0 0.0
    %36 = vmatpush1.msra.mxu0 0.0
    %37 = vmatprep.subr.mxu0 0.0
    %38 = vmatpush1.msra.mxu0 0.0
    %39 = vmatprep.subr.mxu0 0.0
    %40 = vmatpush1.msra.mxu0 0.0
    %41 = vmatprep.subr.mxu0 0.0
    %42 = vmatpush1.msra.mxu0 0.0
    %43 = vmatprep.subr.mxu0 0.0
    %44 = vmatpush1.msra.mxu0 0.0
    %45 = vmatprep.subr.mxu0 0.0
    %46 = vmatpush1.msra.mxu0 0.0
    %47 = vmatprep.subr.mxu0 0.0
    %48 = vmatpush1.msra.mxu0 0.0
    %49 = vmatprep.subr.mxu0 0.0
    %50 = vmatpush1.msra.mxu0 0.0
    %51 = vmatprep.subr.mxu0 0.0
    %52 = vmatpush1.msra.mxu0 0.0
    %53 = vmatprep.subr.mxu0 0.0
    %54 = vmatpush1.msra.mxu0 %v29
    %55 = vmatprep.subr.mxu0 0.0
    %56 = vmatpush1.msra.mxu0 %v17
    %57 = vmatprep.subr.mxu0 0.0
    %58 = vmatpush1.msra.mxu0 %v16
    %59 = vmatprep.subr.mxu0 0.0
    %60 = vmatpush1.msra.mxu0 %v15
    %61 = vmatprep.subr.mxu0 0.0
    %62 = vmatpush1.msra.mxu0 %v14
    %63 = vmatprep.subr.mxu0 0.0
    %64 = vmatpush2.msra.mxu0 0.0
    %65 = vmatprep.subr.mxu0 0.0
    %66 = vmatpush2.msra.mxu0 0.0
    %67 = vmatprep.subr.mxu0 0.0
    %68 = vmatpush2.msra.mxu0 0.0
    %69 = vmatprep.subr.mxu0 0.0
    %70 = vmatpush2.msra.mxu0 0.0
    %71 = vmatprep.subr.mxu0 0.0
    %72 = vmatpush2.msra.mxu0 0.0
    %73 = vmatprep.subr.mxu0 0.0
    %74 = vmatpush2.msra.mxu0 0.0
    %75 = vmatprep.subr.mxu0 0.0
    %76 = vmatpush2.msra.mxu0 0.0
    %77 = vmatprep.subr.mxu0 0.0
    %78 = vmatpush2.msra.mxu0 0.0
    %79 = vmatprep.subr.mxu0 0.0
    %80 = vmatpush2.msra.mxu0 0.0
    %81 = vmatprep.subr.mxu0 0.0
    %82 = vmatpush2.msra.mxu0 0.0
    %83 = vmatprep.subr.mxu0 0.0
    %84 = vmatpush2.msra.mxu0 0.0
    %85 = vmatprep.subr.mxu0 0.0
    %86 = vmatpush2.msra.mxu0 0.0
    %87 = vmatprep.subr.mxu0 0.0
    %88 = vmatpush2.msra.mxu0 0.0
    %89 = vmatprep.subr.mxu0 0.0
    %90 = vmatpush2.msra.mxu0 0.0
    %91 = vmatprep.subr.mxu0 0.0
    %92 = vmatpush2.msra.mxu0 0.0
    %93 = vmatprep.subr.mxu0 0.0
    %94 = vmatpush2.msra.mxu0 0.0
    %95 = vmatprep.mubr.f32.mxu0 0.0
    %96 = vmatmul.mubr.f32.gmra.mxu0 %v25
    %v97 = vpop.f32.mrf.mxu0
    %v98 = vadd.f32 %v22, %v97
    %v99 = vpop.f32.mrf.mxu0
    %100 = vdwg.mxu0
    %v101 = vmax.f32 %v98, 0.0
    %103 = vset.pattern.permute.xlu0 69
    %104 = vperm.xlu0 %103, %v13
    %v105 = vpop.permute.xlu0 %104
    %107 = vrot.lane.b32.xlu0 %v13, 64
    %v108 = vpop.permute.xlu0 %107
    %vm109 = vcmask 39936
    %v110 = vsel %vm109, %v108, 0
    %vm112 = vcmask 1044480
    %v114 = vsel %vm112, %v101, 0
    %116 = vmatprep.subr.mxu0 0.0
    %117 = vmatpush1.msra.mxu0 0.0
    %118 = vmatprep.subr.mxu0 0.0
    %119 = vmatpush1.msra.mxu0 0.0
    %120 = vmatprep.subr.mxu0 0.0
    %121 = vmatpush1.msra.mxu0 0.0
    %122 = vmatprep.subr.mxu0 0.0
    %123 = vmatpush1.msra.mxu0 0.0
    %124 = vmatprep.subr.mxu0 0.0
    %125 = vmatpush1.msra.mxu0 0.0
    %126 = vmatprep.subr.mxu0 0.0
    %127 = vmatpush1.msra.mxu0 0.0
    %128 = vmatprep.subr.mxu0 0.0
    %129 = vmatpush1.msra.mxu0 0.0
    %130 = vmatprep.subr.mxu0 0.0
    %131 = vmatpush1.msra.mxu0 0.0
    %132 = vmatprep.subr.mxu0 0.0
    %133 = vmatpush1.msra.mxu0 0.0
    %134 = vmatprep.subr.mxu0 0.0
    %135 = vmatpush1.msra.mxu0 0.0
    %136 = vmatprep.subr.mxu0 0.0
    %137 = vmatpush1.msra.mxu0 0.0
    %138 = vmatprep.subr.mxu0 0.0
    %139 = vmatpush1.msra.mxu0 0.0
    %140 = vmatprep.subr.mxu0 0.0
    %141 = vmatpush1.msra.mxu0 0.0
    %142 = vmatprep.subr.mxu0 0.0
    %143 = vmatpush1.msra.mxu0 0.0
    %144 = vmatprep.subr.mxu0 0.0
    %145 = vmatpush1.msra.mxu0 0.0
    %146 = vmatprep.subr.mxu0 0.0
    %147 = vmatpush1.msra.mxu0 %v114
    %148 = vmatprep.subr.mxu0 0.0
    %149 = vmatpush2.msra.mxu0 0.0
    %150 = vmatprep.subr.mxu0 0.0
    %151 = vmatpush2.msra.mxu0 0.0
    %152 = vmatprep.subr.mxu0 0.0
    %153 = vmatpush2.msra.mxu0 0.0
    %154 = vmatprep.subr.mxu0 0.0
    %155 = vmatpush2.msra.mxu0 0.0
    %156 = vmatprep.subr.mxu0 0.0
    %157 = vmatpush2.msra.mxu0 0.0
    %158 = vmatprep.subr.mxu0 0.0
    %159 = vmatpush2.msra.mxu0 0.0
    %160 = vmatprep.subr.mxu0 0.0
    %161 = vmatpush2.msra.mxu0 0.0
    %162 = vmatprep.subr.mxu0 0.0
    %163 = vmatpush2.msra.mxu0 0.0
    %164 = vmatprep.subr.mxu0 0.0
    %165 = vmatpush2.msra.mxu0 0.0
    %166 = vmatprep.subr.mxu0 0.0
    %167 = vmatpush2.msra.mxu0 0.0
    %168 = vmatprep.subr.mxu0 0.0
    %169 = vmatpush2.msra.mxu0 0.0
    %170 = vmatprep.subr.mxu0 0.0
    %171 = vmatpush2.msra.mxu0 0.0
    %172 = vmatprep.subr.mxu0 0.0
    %173 = vmatpush2.msra.mxu0 0.0
    %174 = vmatprep.subr.mxu0 0.0
    %175 = vmatpush2.msra.mxu0 0.0
    %176 = vmatprep.subr.mxu0 0.0
    %177 = vmatpush2.msra.mxu0 0.0
    %178 = vmatprep.subr.mxu0 0.0
    %179 = vmatpush2.msra.mxu0 0.0
    %180 = vmatprep.mubr.f32.mxu0 0.0
    %181 = vmatmul.mubr.f32.gmra.mxu0 %v110
    %v182 = vpop.f32.mrf.mxu0
    %v183 = vadd.f32 %v105, %v182
    %v184 = vpop.f32.mrf.mxu0
    %185 = vdwg.mxu0
    %v186 = vsel %vm27, %v183, -inf
    %v187 = vrot.slane %v186, 4
    %v188 = vmax.f32 %v186, %v187
    %v189 = vrot.slane %v188, 2
    %v190 = vmax.f32 %v188, %v189
    %v191 = vrot.slane %v190, 1
    %v192 = vmax.f32 %v190, %v191
    %v193 = vsub.f32 %v183, %v192
    %v194 = vmul.f32 %v193, 1.442695
    %v195 = vpow.pop %v194
    %v196 = vsel %vm27, %v195, 0.0
    %v197 = vrot.slane %v196, 4
    %v198 = vadd.f32 %v196, %v197
    %v199 = vrot.slane %v198, 2
    %v200 = vadd.f32 %v198, %v199
    %v201 = vrot.slane %v200, 1
    %v202 = vadd.f32 %v200, %v201
    %v203 = vrcp.pop %v202
    %v204 = vmul.f32 %v195, %v203
    %205 = vst [vmem:[#allocation2] sm:$0x3] %v204
    // Predicated region
    $region10: #{_forward.1} parent=1 // pred_check
      _
    $region11: #{_forward.1} parent=1 // pred_check_branch
      %207 = sbr.rel (0) target = $region13
    $region12: #{_forward.1} parent=1 // pred_region
      %s209 = ssub.s32 32, 32
      %210 = vsyncadd [#allocation3], %s209
      %s212 = sshll.u32 [#allocation2], 4
      %s213 = int_to_ptr.vmem [resolvable:$true] %s212
      %215 = dma.vmem_to_hbm [thread:$0]  %s213, 32, %s2, [#allocation3]
    $region13: #{_forward.1} parent=1 // pred_fallthru
      _
    // Predicated region
    $region14: #{_forward.1} parent=1 // pred_check
      _
    $region15: #{_forward.1} parent=1 // pred_check_branch
      %217 = sbr.rel (0) target = $region17
    $region16: #{_forward.1} parent=1 // pred_region
      %218 = dma.done [#allocation3], 32
    $region17: #{_forward.1} parent=1 // pred_fallthru
      _
    %219 = vsyncpa [#allocation3], 1

</llo_original>
